<compile_context>
chip_gen: v7x
topology: tpu7x:2x2x1
jax: 0.10.0
libtpu: 0.0.40
codegen_flags: <defaults>
</compile_context>

<pallas_src>
import jax
import jax.numpy as jnp
from jax.experimental import pallas as pl
from jax.experimental.pallas import tpu as pltpu

EPS = 1e-6
COVERAGE_SCALE = 5.0
L1_SCALE = 10.0

_MAX_TILE_ROWS = 1024                      # upper bound on rows per tile
_INPUT_VMEM_BUDGET = 16 * 1024 * 1024      # double-buffered input streams
_VMEM_LIMIT_BYTES = 32 * 1024 * 1024       # scoped VMEM limit (<= physical on all gens)


def _sums_kernel(pb_ref, ptb_ref, pth_ref, gt_ref, mask_ref, tmap_ref, tmask_ref,
                 out_ref):
    i = pl.program_id(0)

    @pl.when(i == 0)
    def _():
        for j in range(8):
            out_ref[j] = 0.0

    f32 = jnp.float32
    pb = pb_ref[...].astype(f32)      # pred['binary']        tile
    ptb = ptb_ref[...].astype(f32)    # pred['thresh_binary'] tile
    pth = pth_ref[...].astype(f32)    # pred['thresh']        tile
    gt = gt_ref[...].astype(f32)
    mask = mask_ref[...].astype(f32)
    tmap = tmap_ref[...].astype(f32)
    tmask = tmask_ref[...].astype(f32)

    gm = gt * mask                                         # reused by 3 sums
    out_ref[0] += jnp.sum(pb * gm)                         # leaky-dice intersection
    out_ref[1] += jnp.sum(gm)                              # gt mass
    out_ref[2] += jnp.sum(pb * mask)                       # pred-binary mass
    out_ref[3] += jnp.sum(ptb * gm)                        # dice intersection (thresh_binary)
    out_ref[4] += jnp.sum(ptb * mask)                      # thresh_binary mass
    out_ref[5] += jnp.sum(jnp.abs(pth - tmap) * tmask)     # masked L1 numerator
    out_ref[6] += jnp.sum(tmask)                           # L1 mask sum
    # out_ref[7] is padding (unused)


def _round_up(x, m):
    return (x + m - 1) // m * m


def _plan_tiles(m_rows, row_bytes):
    """Pick (tile_rows, padded_rows) for the row-tiled reduction."""
    max_tm = _INPUT_VMEM_BUDGET // (2 * row_bytes)   # 2x for the double-buffered pipeline
    max_tm = max(32, min(_MAX_TILE_ROWS, max_tm))
    max_tm -= max_tm % 32                            # multiple of 32: safe for packed dtypes
    if m_rows % 32 == 0:
        start = min(max_tm, m_rows)
        start -= start % 32
        for tm in range(start, 31, -32):
            if m_rows % tm == 0:                     # exact divisor -> no padding needed
                return tm, m_rows
    tm = min(max_tm, _round_up(m_rows, 32))
    return tm, _round_up(m_rows, tm)


def _pad_rows(x, m_pad):
    pad = m_pad - x.shape[0]
    if pad == 0:
        return x
    return jnp.pad(x, ((0, pad), (0, 0)))            # zero rows add 0 to every sum


def _global_sums(pb, ptb, pth, gt, mask, tmap, tmask):
    arrays = (pb, ptb, pth, gt, mask, tmap, tmask)
    m_rows, w = pb.shape
    row_bytes = sum(a.dtype.itemsize for a in arrays) * w
    tm, m_pad = _plan_tiles(m_rows, row_bytes)
    arrays = tuple(_pad_rows(a, m_pad) for a in arrays)
    n_tiles = m_pad // tm

    tile_spec = pl.BlockSpec((tm, w), lambda i: (i, 0))
    bytes_accessed = sum(a.size * a.dtype.itemsize for a in arrays) + 8 * 4
    cost = pl.CostEstimate(flops=15 * m_pad * w, transcendentals=0,
                           bytes_accessed=bytes_accessed)

    return pl.pallas_call(
        _sums_kernel,
        out_shape=jax.ShapeDtypeStruct((8,), jnp.float32),
        grid_spec=pltpu.PrefetchScalarGridSpec(
            num_scalar_prefetch=0,
            grid=(n_tiles,),
            in_specs=[tile_spec] * 7,
            out_specs=pl.BlockSpec(memory_space=pltpu.MemorySpace.SMEM),
        ),
        compiler_params=pltpu.CompilerParams(
            dimension_semantics=("arbitrary",),
            vmem_limit_bytes=_VMEM_LIMIT_BYTES),
        cost_estimate=cost,
    )(*arrays)


def l1_leaky_dice_loss(pred, batch):
    """pred/batch dicts mirror the PyTorch module's inputs (NCHW preds).

    Inputs may be f32/bf16 (masks may be narrow); the kernel casts in-VMEM and
    accumulates in f32.
    """
    binary = pred["binary"]                 # (N, 1, H, W)
    thresh = pred["thresh"]                 # (N, 1, H, W)
    thresh_binary = pred["thresh_binary"]   # (N, 1, H, W)
    gt = batch["gt"]                        # (N, 1, H, W)
    mask = batch["mask"]                    # (N, H, W)
    thresh_map = batch["thresh_map"]        # (N, H, W)
    thresh_mask = batch["thresh_mask"]      # (N, H, W)

    w = binary.shape[-1]
    flat = lambda x: x.reshape(-1, w)       # keep native dtype; no HBM upcast pass

    sums = _global_sums(
        flat(binary[:, 0]),
        flat(thresh_binary[:, 0]),
        flat(thresh[:, 0]),
        flat(gt[:, 0]),
        flat(mask),
        flat(thresh_map),
        flat(thresh_mask),
    )

    s_inter, s_gt, s_pb = sums[0], sums[1], sums[2]
    s_tb_inter, s_tb = sums[3], sums[4]
    s_l1_num, s_l1_mask = sums[5], sums[6]

    # LeakyDiceLoss (coverage_scale = 5)
    coverage = 1.0 - s_inter / (s_gt + EPS)
    excede = 1.0 - s_inter / (s_pb + EPS)
    main_loss = coverage * COVERAGE_SCALE + excede

    # DiceLoss on thresh_binary
    thresh_loss = 1.0 - 2.0 * s_tb_inter / (s_tb + s_gt + EPS)

    # MaskL1Loss (returns 0 when mask sum is 0)
    safe_den = jnp.where(s_l1_mask == 0, 1.0, s_l1_mask)
    l1_loss = jnp.where(s_l1_mask == 0, 0.0, s_l1_num / safe_den)

    loss = main_loss + thresh_loss + l1_loss * L1_SCALE
    metrics = dict(coverage=coverage, excede=excede,
                   l1_loss=l1_loss, thresh_loss=thresh_loss)
    return loss, metrics


if __name__ == "__main__":
    key = jax.random.PRNGKey(0)
    N, H, W = 2, 16, 16
    k = jax.random.split(key, 7)

    pred = {
        "binary": jax.nn.sigmoid(jax.random.normal(k[0], (N, 1, H, W), jnp.float32)),
        "thresh": jax.nn.sigmoid(jax.random.normal(k[1], (N, 1, H, W), jnp.float32)),
        "thresh_binary": jax.nn.sigmoid(jax.random.normal(k[2], (N, 1, H, W), jnp.float32)),
    }
    # Masks / gt are kept in a narrow dtype (bf16, values exactly 0/1) to exercise
    # the reduced-HBM-traffic path; the kernel casts to f32 in-VMEM.
    batch = {
        "gt": (jax.random.uniform(k[3], (N, 1, H, W)) > 0.5).astype(jnp.bfloat16),
        "mask": (jax.random.uniform(k[4], (N, H, W)) > 0.2).astype(jnp.bfloat16),
        "thresh_map": jax.random.uniform(k[5], (N, H, W), jnp.float32),
        "thresh_mask": (jax.random.uniform(k[6], (N, H, W)) > 0.3).astype(jnp.bfloat16),
    }

    loss, metrics = l1_leaky_dice_loss(pred, batch)
    jax.block_until_ready(loss)
    jax.block_until_ready(metrics)

    # sanity check against a pure-JAX reference of the same math
    def ref():
        pb = pred["binary"][:, 0]
        ptb = pred["thresh_binary"][:, 0]
        pth = pred["thresh"][:, 0]
        g = batch["gt"][:, 0].astype(jnp.float32)
        m = batch["mask"].astype(jnp.float32)
        tmap = batch["thresh_map"]
        tmask = batch["thresh_mask"].astype(jnp.float32)
        cov = 1 - (pb * g * m).sum() / ((g * m).sum() + EPS)
        exc = 1 - (pb * g * m).sum() / ((pb * m).sum() + EPS)
        main = cov * COVERAGE_SCALE + exc
        dice = 1 - 2 * (ptb * g * m).sum() / ((ptb * m).sum() + (g * m).sum() + EPS)
        msum = tmask.sum()
        l1 = jnp.where(msum == 0, 0.0,
                       (jnp.abs(pth - tmap) * tmask).sum()
                       / jnp.where(msum == 0, 1.0, msum))
        return main + dice + l1 * L1_SCALE

    assert jnp.allclose(loss, ref(), rtol=1e-5, atol=1e-5), (loss, ref())
    print("KERNEL_OK")
</pallas_src>

<mosaic_0001>
module attributes {stable_mosaic.version = 11 : i64} {
  func.func @_sums_kernel(%arg0: i32, %arg1: memref<32x16xf32, #tpu.memory_space<vmem>>, %arg2: memref<32x16xf32, #tpu.memory_space<vmem>>, %arg3: memref<32x16xf32, #tpu.memory_space<vmem>>, %arg4: memref<32x16xbf16, #tpu.memory_space<vmem>>, %arg5: memref<32x16xbf16, #tpu.memory_space<vmem>>, %arg6: memref<32x16xf32, #tpu.memory_space<vmem>>, %arg7: memref<32x16xbf16, #tpu.memory_space<vmem>>, %arg8: memref<8xf32, #tpu.memory_space<smem>>) attributes {dimension_semantics = [#tpu.dimension_semantics<arbitrary>], iteration_bounds = array<i64: 1>, scalar_prefetch = 0 : i64, scratch_operands = 0 : i64, tpu.core_type = #tpu.core_type<tc>, window_params = [{transform_indices = @transform_0, window_bounds = array<i64: 32, 16>}, {transform_indices = @transform_1, window_bounds = array<i64: 32, 16>}, {transform_indices = @transform_2, window_bounds = array<i64: 32, 16>}, {transform_indices = @transform_3, window_bounds = array<i64: 32, 16>}, {transform_indices = @transform_4, window_bounds = array<i64: 32, 16>}, {transform_indices = @transform_5, window_bounds = array<i64: 32, 16>}, {transform_indices = @transform_6, window_bounds = array<i64: 32, 16>}, {transform_indices = @transform_7, window_bounds = array<i64: 8>}]} {
    %c0_i32 = arith.constant 0 : i32
    %0 = arith.cmpi eq, %arg0, %c0_i32 : i32
    %1 = arith.extui %0 : i1 to i32
    %c0_i32_0 = arith.constant 0 : i32
    %2 = arith.cmpi ne, %1, %c0_i32_0 : i32
    scf.if %2 {
      %cst_28 = arith.constant 0.000000e+00 : f32
      %c0_29 = arith.constant 0 : index
      %70 = memref.load %arg8[%c0_29] : memref<8xf32, #tpu.memory_space<smem>>
      memref.store %cst_28, %arg8[%c0_29] : memref<8xf32, #tpu.memory_space<smem>>
      %cst_30 = arith.constant 0.000000e+00 : f32
      %c1_31 = arith.constant 1 : index
      %71 = memref.load %arg8[%c1_31] : memref<8xf32, #tpu.memory_space<smem>>
      memref.store %cst_30, %arg8[%c1_31] : memref<8xf32, #tpu.memory_space<smem>>
      %cst_32 = arith.constant 0.000000e+00 : f32
      %c2_33 = arith.constant 2 : index
      %72 = memref.load %arg8[%c2_33] : memref<8xf32, #tpu.memory_space<smem>>
      memref.store %cst_32, %arg8[%c2_33] : memref<8xf32, #tpu.memory_space<smem>>
      %cst_34 = arith.constant 0.000000e+00 : f32
      %c3_35 = arith.constant 3 : index
      %73 = memref.load %arg8[%c3_35] : memref<8xf32, #tpu.memory_space<smem>>
      memref.store %cst_34, %arg8[%c3_35] : memref<8xf32, #tpu.memory_space<smem>>
      %cst_36 = arith.constant 0.000000e+00 : f32
      %c4_37 = arith.constant 4 : index
      %74 = memref.load %arg8[%c4_37] : memref<8xf32, #tpu.memory_space<smem>>
      memref.store %cst_36, %arg8[%c4_37] : memref<8xf32, #tpu.memory_space<smem>>
      %cst_38 = arith.constant 0.000000e+00 : f32
      %c5_39 = arith.constant 5 : index
      %75 = memref.load %arg8[%c5_39] : memref<8xf32, #tpu.memory_space<smem>>
      memref.store %cst_38, %arg8[%c5_39] : memref<8xf32, #tpu.memory_space<smem>>
      %cst_40 = arith.constant 0.000000e+00 : f32
      %c6_41 = arith.constant 6 : index
      %76 = memref.load %arg8[%c6_41] : memref<8xf32, #tpu.memory_space<smem>>
      memref.store %cst_40, %arg8[%c6_41] : memref<8xf32, #tpu.memory_space<smem>>
      %cst_42 = arith.constant 0.000000e+00 : f32
      %c7 = arith.constant 7 : index
      %77 = memref.load %arg8[%c7] : memref<8xf32, #tpu.memory_space<smem>>
      memref.store %cst_42, %arg8[%c7] : memref<8xf32, #tpu.memory_space<smem>>
    } else {
    }
    %c0 = arith.constant 0 : index
    %c0_1 = arith.constant 0 : index
    %3 = vector.load %arg1[%c0, %c0_1] : memref<32x16xf32, #tpu.memory_space<vmem>>, vector<32x16xf32>
    %c0_2 = arith.constant 0 : index
    %c0_3 = arith.constant 0 : index
    %4 = vector.load %arg2[%c0_2, %c0_3] : memref<32x16xf32, #tpu.memory_space<vmem>>, vector<32x16xf32>
    %c0_4 = arith.constant 0 : index
    %c0_5 = arith.constant 0 : index
    %5 = vector.load %arg3[%c0_4, %c0_5] : memref<32x16xf32, #tpu.memory_space<vmem>>, vector<32x16xf32>
    %c0_6 = arith.constant 0 : index
    %c0_7 = arith.constant 0 : index
    %6 = vector.load %arg4[%c0_6, %c0_7] : memref<32x16xbf16, #tpu.memory_space<vmem>>, vector<32x16xbf16>
    %7 = arith.extf %6 : vector<32x16xbf16> to vector<32x16xf32>
    %c0_8 = arith.constant 0 : index
    %c0_9 = arith.constant 0 : index
    %8 = vector.load %arg5[%c0_8, %c0_9] : memref<32x16xbf16, #tpu.memory_space<vmem>>, vector<32x16xbf16>
    %9 = arith.extf %8 : vector<32x16xbf16> to vector<32x16xf32>
    %c0_10 = arith.constant 0 : index
    %c0_11 = arith.constant 0 : index
    %10 = vector.load %arg6[%c0_10, %c0_11] : memref<32x16xf32, #tpu.memory_space<vmem>>, vector<32x16xf32>
    %c0_12 = arith.constant 0 : index
    %c0_13 = arith.constant 0 : index
    %11 = vector.load %arg7[%c0_12, %c0_13] : memref<32x16xbf16, #tpu.memory_space<vmem>>, vector<32x16xbf16>
    %12 = arith.extf %11 : vector<32x16xbf16> to vector<32x16xf32>
    %13 = arith.mulf %7, %9 : vector<32x16xf32>
    %c0_14 = arith.constant 0 : index
    %14 = memref.load %arg8[%c0_14] : memref<8xf32, #tpu.memory_space<smem>>
    %15 = arith.mulf %3, %13 : vector<32x16xf32>
    %16 = vector.shape_cast %15 : vector<32x16xf32> to vector<1x32x16xf32>
    %cst = arith.constant dense<0.000000e+00> : vector<1xf32>
    %17 = vector.multi_reduction <add>, %16, %cst [1, 2] : vector<1x32x16xf32> to vector<1xf32>
    %18 = vector.shape_cast %17 : vector<1xf32> to vector<1x1x1xf32>
    %19 = vector.extract %18[0, 0, 0] : f32 from vector<1x1x1xf32>
    %20 = arith.addf %14, %19 : f32
    %c0_15 = arith.constant 0 : index
    %21 = memref.load %arg8[%c0_15] : memref<8xf32, #tpu.memory_space<smem>>
    memref.store %20, %arg8[%c0_15] : memref<8xf32, #tpu.memory_space<smem>>
    %c1 = arith.constant 1 : index
    %22 = memref.load %arg8[%c1] : memref<8xf32, #tpu.memory_space<smem>>
    %23 = vector.shape_cast %13 : vector<32x16xf32> to vector<1x32x16xf32>
    %cst_16 = arith.constant dense<0.000000e+00> : vector<1xf32>
    %24 = vector.multi_reduction <add>, %23, %cst_16 [1, 2] : vector<1x32x16xf32> to vector<1xf32>
    %25 = vector.shape_cast %24 : vector<1xf32> to vector<1x1x1xf32>
    %26 = vector.extract %25[0, 0, 0] : f32 from vector<1x1x1xf32>
    %27 = arith.addf %22, %26 : f32
    %c1_17 = arith.constant 1 : index
    %28 = memref.load %arg8[%c1_17] : memref<8xf32, #tpu.memory_space<smem>>
    memref.store %27, %arg8[%c1_17] : memref<8xf32, #tpu.memory_space<smem>>
    %c2 = arith.constant 2 : index
    %29 = memref.load %arg8[%c2] : memref<8xf32, #tpu.memory_space<smem>>
    %30 = arith.mulf %3, %9 : vector<32x16xf32>
    %31 = vector.shape_cast %30 : vector<32x16xf32> to vector<1x32x16xf32>
    %cst_18 = arith.constant dense<0.000000e+00> : vector<1xf32>
    %32 = vector.multi_reduction <add>, %31, %cst_18 [1, 2] : vector<1x32x16xf32> to vector<1xf32>
    %33 = vector.shape_cast %32 : vector<1xf32> to vector<1x1x1xf32>
    %34 = vector.extract %33[0, 0, 0] : f32 from vector<1x1x1xf32>
    %35 = arith.addf %29, %34 : f32
    %c2_19 = arith.constant 2 : index
    %36 = memref.load %arg8[%c2_19] : memref<8xf32, #tpu.memory_space<smem>>
    memref.store %35, %arg8[%c2_19] : memref<8xf32, #tpu.memory_space<smem>>
    %c3 = arith.constant 3 : index
    %37 = memref.load %arg8[%c3] : memref<8xf32, #tpu.memory_space<smem>>
    %38 = arith.mulf %4, %13 : vector<32x16xf32>
    %39 = vector.shape_cast %38 : vector<32x16xf32> to vector<1x32x16xf32>
    %cst_20 = arith.constant dense<0.000000e+00> : vector<1xf32>
    %40 = vector.multi_reduction <add>, %39, %cst_20 [1, 2] : vector<1x32x16xf32> to vector<1xf32>
    %41 = vector.shape_cast %40 : vector<1xf32> to vector<1x1x1xf32>
    %42 = vector.extract %41[0, 0, 0] : f32 from vector<1x1x1xf32>
    %43 = arith.addf %37, %42 : f32
    %c3_21 = arith.constant 3 : index
    %44 = memref.load %arg8[%c3_21] : memref<8xf32, #tpu.memory_space<smem>>
    memref.store %43, %arg8[%c3_21] : memref<8xf32, #tpu.memory_space<smem>>
    %c4 = arith.constant 4 : index
    %45 = memref.load %arg8[%c4] : memref<8xf32, #tpu.memory_space<smem>>
    %46 = arith.mulf %4, %9 : vector<32x16xf32>
    %47 = vector.shape_cast %46 : vector<32x16xf32> to vector<1x32x16xf32>
    %cst_22 = arith.constant dense<0.000000e+00> : vector<1xf32>
    %48 = vector.multi_reduction <add>, %47, %cst_22 [1, 2] : vector<1x32x16xf32> to vector<1xf32>
    %49 = vector.shape_cast %48 : vector<1xf32> to vector<1x1x1xf32>
    %50 = vector.extract %49[0, 0, 0] : f32 from vector<1x1x1xf32>
    %51 = arith.addf %45, %50 : f32
    %c4_23 = arith.constant 4 : index
    %52 = memref.load %arg8[%c4_23] : memref<8xf32, #tpu.memory_space<smem>>
    memref.store %51, %arg8[%c4_23] : memref<8xf32, #tpu.memory_space<smem>>
    %c5 = arith.constant 5 : index
    %53 = memref.load %arg8[%c5] : memref<8xf32, #tpu.memory_space<smem>>
    %54 = arith.subf %5, %10 : vector<32x16xf32>
    %55 = math.absf %54 : vector<32x16xf32>
    %56 = arith.mulf %55, %12 : vector<32x16xf32>
    %57 = vector.shape_cast %56 : vector<32x16xf32> to vector<1x32x16xf32>
    %cst_24 = arith.constant dense<0.000000e+00> : vector<1xf32>
    %58 = vector.multi_reduction <add>, %57, %cst_24 [1, 2] : vector<1x32x16xf32> to vector<1xf32>
    %59 = vector.shape_cast %58 : vector<1xf32> to vector<1x1x1xf32>
    %60 = vector.extract %59[0, 0, 0] : f32 from vector<1x1x1xf32>
    %61 = arith.addf %53, %60 : f32
    %c5_25 = arith.constant 5 : index
    %62 = memref.load %arg8[%c5_25] : memref<8xf32, #tpu.memory_space<smem>>
    memref.store %61, %arg8[%c5_25] : memref<8xf32, #tpu.memory_space<smem>>
    %c6 = arith.constant 6 : index
    %63 = memref.load %arg8[%c6] : memref<8xf32, #tpu.memory_space<smem>>
    %64 = vector.shape_cast %12 : vector<32x16xf32> to vector<1x32x16xf32>
    %cst_26 = arith.constant dense<0.000000e+00> : vector<1xf32>
    %65 = vector.multi_reduction <add>, %64, %cst_26 [1, 2] : vector<1x32x16xf32> to vector<1xf32>
    %66 = vector.shape_cast %65 : vector<1xf32> to vector<1x1x1xf32>
    %67 = vector.extract %66[0, 0, 0] : f32 from vector<1x1x1xf32>
    %68 = arith.addf %63, %67 : f32
    %c6_27 = arith.constant 6 : index
    %69 = memref.load %arg8[%c6_27] : memref<8xf32, #tpu.memory_space<smem>>
    memref.store %68, %arg8[%c6_27] : memref<8xf32, #tpu.memory_space<smem>>
    return
  }
  func.func @transform_0(%arg0: i32) -> (i32, i32) {
    %c0_i32 = arith.constant 0 : i32
    %c0_i32_0 = arith.constant 0 : i32
    return %arg0, %c0_i32 : i32, i32
  }
  func.func @transform_1(%arg0: i32) -> (i32, i32) {
    %c0_i32 = arith.constant 0 : i32
    %c0_i32_0 = arith.constant 0 : i32
    return %arg0, %c0_i32 : i32, i32
  }
  func.func @transform_2(%arg0: i32) -> (i32, i32) {
    %c0_i32 = arith.constant 0 : i32
    %c0_i32_0 = arith.constant 0 : i32
    return %arg0, %c0_i32 : i32, i32
  }
  func.func @transform_3(%arg0: i32) -> (i32, i32) {
    %c0_i32 = arith.constant 0 : i32
    %c0_i32_0 = arith.constant 0 : i32
    return %arg0, %c0_i32 : i32, i32
  }
  func.func @transform_4(%arg0: i32) -> (i32, i32) {
    %c0_i32 = arith.constant 0 : i32
    %c0_i32_0 = arith.constant 0 : i32
    return %arg0, %c0_i32 : i32, i32
  }
  func.func @transform_5(%arg0: i32) -> (i32, i32) {
    %c0_i32 = arith.constant 0 : i32
    %c0_i32_0 = arith.constant 0 : i32
    return %arg0, %c0_i32 : i32, i32
  }
  func.func @transform_6(%arg0: i32) -> (i32, i32) {
    %c0_i32 = arith.constant 0 : i32
    %c0_i32_0 = arith.constant 0 : i32
    return %arg0, %c0_i32 : i32, i32
  }
  func.func @transform_7(%arg0: i32) -> i32 {
    %c0_i32 = arith.constant 0 : i32
    %c0_i32_0 = arith.constant 0 : i32
    return %c0_i32 : i32
  }
}

</mosaic_0001>

<llo_original>
// kernel: tpu_custom_call.1
$region0: #{tpu_custom_call.1}
  #allocation0 [shape = 'u32[]', space=smem, size = 0x4, offset = 0x4, fixed_abs, tag = 'smem constant byte address 0x4 - core index']
  #allocation1 [shape = 'u32[144,128]{1,0:T(1,128)}', space=vmem, size = 0x12000, scoped, tag = 'internal scratch']
  %s0 = inlined_call_operand.vmem [shape: f32[32,16], index: 0, kind: input, shape index: {}]
  %s1 = inlined_call_operand.vmem [shape: f32[32,16], index: 1, kind: input, shape index: {}]
  %s2 = inlined_call_operand.vmem [shape: f32[32,16], index: 2, kind: input, shape index: {}]
  %s3 = inlined_call_operand.vmem [shape: bf16[32,16], index: 3, kind: input, shape index: {}]
  %s4 = inlined_call_operand.vmem [shape: bf16[32,16], index: 4, kind: input, shape index: {}]
  %s5 = inlined_call_operand.vmem [shape: f32[32,16], index: 5, kind: input, shape index: {}]
  %s6 = inlined_call_operand.vmem [shape: bf16[32,16], index: 6, kind: input, shape index: {}]
  %s7 = inlined_call_operand.hbm [shape: f32[8], index: 7, kind: output, shape index: {}]
  %s8 = sld [smem:[#allocation0]]
  $region42: #{tpu_custom_call.1} parent=0
    _
  %s10 = ssub.s32 1, %s8
  %s11 = scalar_select 0, %s10, %s8
  $region1: #{tpu_custom_call.1} parent=0
    #allocation2 [shape = 'u8[512]{0}', space=smem, size = 0x200, scoped, tag = 'output window, operand 0, single buffered']
    #allocation3 [shape = 's32[1]{0}', space=sflag, size = 0x4, scoped, tag = 'scoped memory for tpu_custom_call.1']
    %12 = vsyncpa [#allocation3], 0
    // Predicated region
    $region2: #{tpu_custom_call.1} parent=1 // pred_check
      _
    $region3: #{tpu_custom_call.1} parent=1 // pred_check_branch
      %14 = sbr.rel (0) target = $region5
    $region4: #{tpu_custom_call.1} parent=1 // pred_region
      _
    $region5: #{tpu_custom_call.1} parent=1 // pred_fallthru
      _
    // Predicated region
    $region6: #{tpu_custom_call.1} parent=1 // pred_check
      _
    $region7: #{tpu_custom_call.1} parent=1 // pred_check_branch
      %16 = sbr.rel (0) target = $region9
    $region8: #{tpu_custom_call.1} parent=1 // pred_region
      _
    $region9: #{tpu_custom_call.1} parent=1 // pred_fallthru
      _
    // Predicated region
    $region10: #{tpu_custom_call.1} parent=1 // pred_check
      _
    $region11: #{tpu_custom_call.1} parent=1 // pred_check_branch
      %18 = sbr.rel (0) target = $region13
    $region12: #{tpu_custom_call.1} parent=1 // pred_region
      _
    $region13: #{tpu_custom_call.1} parent=1 // pred_fallthru
      _
    // Predicated region
    $region14: #{tpu_custom_call.1} parent=1 // pred_check
      _
    $region15: #{tpu_custom_call.1} parent=1 // pred_check_branch
      %20 = sbr.rel (0) target = $region17
    $region16: #{tpu_custom_call.1} parent=1 // pred_region
      _
    $region17: #{tpu_custom_call.1} parent=1 // pred_fallthru
      _
    // Predicated region
    $region18: #{tpu_custom_call.1} parent=1 // pred_check
      _
    $region19: #{tpu_custom_call.1} parent=1 // pred_check_branch
      %22 = sbr.rel (0) target = $region21
    $region20: #{tpu_custom_call.1} parent=1 // pred_region
      _
    $region21: #{tpu_custom_call.1} parent=1 // pred_fallthru
      _
    // Predicated region
    $region22: #{tpu_custom_call.1} parent=1 // pred_check
      _
    $region23: #{tpu_custom_call.1} parent=1 // pred_check_branch
      %24 = sbr.rel (0) target = $region25
    $region24: #{tpu_custom_call.1} parent=1 // pred_region
      _
    $region25: #{tpu_custom_call.1} parent=1 // pred_fallthru
      _
    // Predicated region
    $region26: #{tpu_custom_call.1} parent=1 // pred_check
      _
    $region27: #{tpu_custom_call.1} parent=1 // pred_check_branch
      %26 = sbr.rel (0) target = $region29
    $region28: #{tpu_custom_call.1} parent=1 // pred_region
      _
    $region29: #{tpu_custom_call.1} parent=1 // pred_fallthru
      _
    %p27 = scmp.eq.s32.totalorder 0, 0
    // Predicated region
    $region30: #{tpu_custom_call.1} parent=1 // pred_check
      %p28 = pneg %p27
    $region31: #{tpu_custom_call.1} parent=1 // pred_check_branch
      %30 = sbr.rel (%p28) target = $region33
    $region32: #{tpu_custom_call.1} parent=1 // pred_region
      %s31 = scalar_lea.smem [#allocation2], 0
      %32 = sst [smem:[%s31]] 0.0
      %s33 = scalar_lea.smem [#allocation2], 1
      %34 = sst [smem:[%s33]] 0.0
      %s35 = scalar_lea.smem [#allocation2], 2
      %36 = sst [smem:[%s35]] 0.0
      %s37 = scalar_lea.smem [#allocation2], 3
      %38 = sst [smem:[%s37]] 0.0
      %s39 = scalar_lea.smem [#allocation2], 4
      %40 = sst [smem:[%s39]] 0.0
      %s41 = scalar_lea.smem [#allocation2], 5
      %42 = sst [smem:[%s41]] 0.0
      %s43 = scalar_lea.smem [#allocation2], 6
      %44 = sst [smem:[%s43]] 0.0
      %s45 = scalar_lea.smem [#allocation2], 7
      %46 = sst [smem:[%s45]] 0.0
    $region33: #{tpu_custom_call.1} parent=1 // pred_fallthru
      _
    %v47 = vld [vmem:[%s0] sm:$0xff]
    %v48 = vld [vmem:[%s0 + $0x8] sm:$0xff]
    %v49 = vld [vmem:[%s0 + $0x10] sm:$0xff]
    %v50 = vld [vmem:[%s0 + $0x18] sm:$0xff]
    %v51 = vld [vmem:[%s1] sm:$0xff]
    %v52 = vld [vmem:[%s1 + $0x8] sm:$0xff]
    %v53 = vld [vmem:[%s1 + $0x10] sm:$0xff]
    %v54 = vld [vmem:[%s1 + $0x18] sm:$0xff]
    %v55 = vld [vmem:[%s2] sm:$0xff]
    %v56 = vld [vmem:[%s2 + $0x8] sm:$0xff]
    %v57 = vld [vmem:[%s2 + $0x10] sm:$0xff]
    %v58 = vld [vmem:[%s2 + $0x18] sm:$0xff]
    %v59 = vld [vmem:[%s3] sm:$0xf]
    %v60 = vld [vmem:[%s3 + $0x4] sm:$0xf]
    %v61 = vld [vmem:[%s3 + $0x8] sm:$0xf]
    %v62 = vld [vmem:[%s3 + $0xc] sm:$0xf]
    %v63 = vunpack.c.l.bf16 %v59
    %v64 = vunpack.c.l.bf16 %v60
    %v65 = vunpack.c.l.bf16 %v61
    %v66 = vunpack.c.l.bf16 %v62
    %v67 = vld [vmem:[%s4] sm:$0xf]
    %v68 = vld [vmem:[%s4 + $0x4] sm:$0xf]
    %v69 = vld [vmem:[%s4 + $0x8] sm:$0xf]
    %v70 = vld [vmem:[%s4 + $0xc] sm:$0xf]
    %v71 = vunpack.c.l.bf16 %v67
    %v72 = vunpack.c.l.bf16 %v68
    %v73 = vunpack.c.l.bf16 %v69
    %v74 = vunpack.c.l.bf16 %v70
    %v75 = vld [vmem:[%s5] sm:$0xff]
    %v76 = vld [vmem:[%s5 + $0x8] sm:$0xff]
    %v77 = vld [vmem:[%s5 + $0x10] sm:$0xff]
    %v78 = vld [vmem:[%s5 + $0x18] sm:$0xff]
    %v79 = vld [vmem:[%s6] sm:$0xf]
    %v80 = vld [vmem:[%s6 + $0x4] sm:$0xf]
    %v81 = vld [vmem:[%s6 + $0x8] sm:$0xf]
    %v82 = vld [vmem:[%s6 + $0xc] sm:$0xf]
    %v83 = vunpack.c.l.bf16 %v79
    %v84 = vunpack.c.l.bf16 %v80
    %v85 = vunpack.c.l.bf16 %v81
    %v86 = vunpack.c.l.bf16 %v82
    %v87 = vmul.f32 %v63, %v71
    %v88 = vmul.f32 %v64, %v72
    %v89 = vmul.f32 %v65, %v73
    %v90 = vmul.f32 %v66, %v74
    %s91 = sld [smem:[#allocation2]]
    %v92 = vmul.f32 %v47, %v87
    %v93 = vmul.f32 %v48, %v88
    %v94 = vmul.f32 %v49, %v89
    %v95 = vmul.f32 %v50, %v90
    %vm96 = vcmask 130048
    %v97 = vsel %vm96, %v92, 0.0
    %v98 = vsel %vm96, %v93, 0.0
    %v99 = vadd.f32 %v97, %v98
    %v100 = vsel %vm96, %v94, 0.0
    %v101 = vadd.f32 %v99, %v100
    %v102 = vsel %vm96, %v95, 0.0
    %v103 = vadd.f32 %v101, %v102
    %104 = vadd.xlane.f32.xlu0 %v103
    %v105 = vpop.xlane.xlu0 %104
    %v106 = vrot.slane %v105, 4
    %v107 = vadd.f32 %v105, %v106
    %v108 = vrot.slane %v107, 2
    %v109 = vadd.f32 %v107, %v108
    %v110 = vrot.slane %v109, 1
    %v111 = vadd.f32 %v109, %v110
    %s112 = vtos %v111
    %s113 = sadd.f32 %s91, %s112
    %s114 = scalar_lea.smem [#allocation2], 0
    %115 = sst [smem:[%s114]] %s113
    %s116 = sld [smem:[#allocation2 + $0x1]]
    %v117 = vsel %vm96, %v87, 0.0
    %v118 = vsel %vm96, %v88, 0.0
    %v119 = vadd.f32 %v117, %v118
    %v120 = vsel %vm96, %v89, 0.0
    %v121 = vadd.f32 %v119, %v120
    %v122 = vsel %vm96, %v90, 0.0
    %v123 = vadd.f32 %v121, %v122
    %124 = vadd.xlane.f32.xlu0 %v123
    %v125 = vpop.xlane.xlu0 %124
    %v126 = vrot.slane %v125, 4
    %v127 = vadd.f32 %v125, %v126
    %v128 = vrot.slane %v127, 2
    %v129 = vadd.f32 %v127, %v128
    %v130 = vrot.slane %v129, 1
    %v131 = vadd.f32 %v129, %v130
    %s132 = vtos %v131
    %s133 = sadd.f32 %s116, %s132
    %s134 = scalar_lea.smem [#allocation2], 1
    %135 = sst [smem:[%s134]] %s133
    %s136 = sld [smem:[#allocation2 + $0x2]]
    %v137 = vmul.f32 %v47, %v71
    %v138 = vmul.f32 %v48, %v72
    %v139 = vmul.f32 %v49, %v73
    %v140 = vmul.f32 %v50, %v74
    %v141 = vsel %vm96, %v137, 0.0
    %v142 = vsel %vm96, %v138, 0.0
    %v143 = vadd.f32 %v141, %v142
    %v144 = vsel %vm96, %v139, 0.0
    %v145 = vadd.f32 %v143, %v144
    %v146 = vsel %vm96, %v140, 0.0
    %v147 = vadd.f32 %v145, %v146
    %148 = vadd.xlane.f32.xlu0 %v147
    %v149 = vpop.xlane.xlu0 %148
    %v150 = vrot.slane %v149, 4
    %v151 = vadd.f32 %v149, %v150
    %v152 = vrot.slane %v151, 2
    %v153 = vadd.f32 %v151, %v152
    %v154 = vrot.slane %v153, 1
    %v155 = vadd.f32 %v153, %v154
    %s156 = vtos %v155
    %s157 = sadd.f32 %s136, %s156
    %s158 = scalar_lea.smem [#allocation2], 2
    %159 = sst [smem:[%s158]] %s157
    %s160 = sld [smem:[#allocation2 + $0x3]]
    %v161 = vmul.f32 %v51, %v87
    %v162 = vmul.f32 %v52, %v88
    %v163 = vmul.f32 %v53, %v89
    %v164 = vmul.f32 %v54, %v90
    %v165 = vsel %vm96, %v161, 0.0
    %v166 = vsel %vm96, %v162, 0.0
    %v167 = vadd.f32 %v165, %v166
    %v168 = vsel %vm96, %v163, 0.0
    %v169 = vadd.f32 %v167, %v168
    %v170 = vsel %vm96, %v164, 0.0
    %v171 = vadd.f32 %v169, %v170
    %172 = vadd.xlane.f32.xlu0 %v171
    %v173 = vpop.xlane.xlu0 %172
    %v174 = vrot.slane %v173, 4
    %v175 = vadd.f32 %v173, %v174
    %v176 = vrot.slane %v175, 2
    %v177 = vadd.f32 %v175, %v176
    %v178 = vrot.slane %v177, 1
    %v179 = vadd.f32 %v177, %v178
    %s180 = vtos %v179
    %s181 = sadd.f32 %s160, %s180
    %s182 = scalar_lea.smem [#allocation2], 3
    %183 = sst [smem:[%s182]] %s181
    %s184 = sld [smem:[#allocation2 + $0x4]]
    %v185 = vmul.f32 %v51, %v71
    %v186 = vmul.f32 %v52, %v72
    %v187 = vmul.f32 %v53, %v73
    %v188 = vmul.f32 %v54, %v74
    %v189 = vsel %vm96, %v185, 0.0
    %v190 = vsel %vm96, %v186, 0.0
    %v191 = vadd.f32 %v189, %v190
    %v192 = vsel %vm96, %v187, 0.0
    %v193 = vadd.f32 %v191, %v192
    %v194 = vsel %vm96, %v188, 0.0
    %v195 = vadd.f32 %v193, %v194
    %196 = vadd.xlane.f32.xlu0 %v195
    %v197 = vpop.xlane.xlu0 %196
    %v198 = vrot.slane %v197, 4
    %v199 = vadd.f32 %v197, %v198
    %v200 = vrot.slane %v199, 2
    %v201 = vadd.f32 %v199, %v200
    %v202 = vrot.slane %v201, 1
    %v203 = vadd.f32 %v201, %v202
    %s204 = vtos %v203
    %s205 = sadd.f32 %s184, %s204
    %s206 = scalar_lea.smem [#allocation2], 4
    %207 = sst [smem:[%s206]] %s205
    %s208 = sld [smem:[#allocation2 + $0x5]]
    %v209 = vsub.f32 %v55, %v75
    %v210 = vsub.f32 %v56, %v76
    %v211 = vsub.f32 %v57, %v77
    %v212 = vsub.f32 %v58, %v78
    %v213 = vand.u32 2147483647, %v209
    %v214 = vand.u32 2147483647, %v210
    %v215 = vand.u32 2147483647, %v211
    %v216 = vand.u32 2147483647, %v212
    %v217 = vmul.f32 %v213, %v83
    %v218 = vmul.f32 %v214, %v84
    %v219 = vmul.f32 %v215, %v85
    %v220 = vmul.f32 %v216, %v86
    %v221 = vsel %vm96, %v217, 0.0
    %v222 = vsel %vm96, %v218, 0.0
    %v223 = vadd.f32 %v221, %v222
    %v224 = vsel %vm96, %v219, 0.0
    %v225 = vadd.f32 %v223, %v224
    %v226 = vsel %vm96, %v220, 0.0
    %v227 = vadd.f32 %v225, %v226
    %228 = vadd.xlane.f32.xlu0 %v227
    %v229 = vpop.xlane.xlu0 %228
    %v230 = vrot.slane %v229, 4
    %v231 = vadd.f32 %v229, %v230
    %v232 = vrot.slane %v231, 2
    %v233 = vadd.f32 %v231, %v232
    %v234 = vrot.slane %v233, 1
    %v235 = vadd.f32 %v233, %v234
    %s236 = vtos %v235
    %s237 = sadd.f32 %s208, %s236
    %s238 = scalar_lea.smem [#allocation2], 5
    %239 = sst [smem:[%s238]] %s237
    %s240 = sld [smem:[#allocation2 + $0x6]]
    %v241 = vsel %vm96, %v83, 0.0
    %v242 = vsel %vm96, %v84, 0.0
    %v243 = vadd.f32 %v241, %v242
    %v244 = vsel %vm96, %v85, 0.0
    %v245 = vadd.f32 %v243, %v244
    %v246 = vsel %vm96, %v86, 0.0
    %v247 = vadd.f32 %v245, %v246
    %248 = vadd.xlane.f32.xlu0 %v247
    %v249 = vpop.xlane.xlu0 %248
    %v250 = vrot.slane %v249, 4
    %v251 = vadd.f32 %v249, %v250
    %v252 = vrot.slane %v251, 2
    %v253 = vadd.f32 %v251, %v252
    %v254 = vrot.slane %v253, 1
    %v255 = vadd.f32 %v253, %v254
    %s256 = vtos %v255
    %s257 = sadd.f32 %s240, %s256
    %s258 = scalar_lea.smem [#allocation2], 6
    %259 = sst [smem:[%s258]] %s257
    // Predicated region
    $region34: #{tpu_custom_call.1} parent=1 // pred_check
      _
    $region35: #{tpu_custom_call.1} parent=1 // pred_check_branch
      %261 = sbr.rel (0) target = $region37
    $region36: #{tpu_custom_call.1} parent=1 // pred_region
      %s263 = ssub.s32 16, 16
      %264 = vsyncadd [#allocation3], %s263
      %267 = dma.smem_to_hbm [#allocation2], 16, %s7, [#allocation3]
    $region37: #{tpu_custom_call.1} parent=1 // pred_fallthru
      _
    // Predicated region
    $region38: #{tpu_custom_call.1} parent=1 // pred_check
      _
    $region39: #{tpu_custom_call.1} parent=1 // pred_check_branch
      %269 = sbr.rel (0) target = $region41
    $region40: #{tpu_custom_call.1} parent=1 // pred_region
      %270 = dma.done [#allocation3], 16
    $region41: #{tpu_custom_call.1} parent=1 // pred_fallthru
      _
    %271 = sfence
    %272 = vsyncpa [#allocation3], 1

</llo_original>
